<compile_context>
chip_gen: v6e
topology: v6e:2x2x1
jax: 0.10.0
libtpu: 0.0.40
codegen_flags: <defaults>
</compile_context>

<pallas_src>
import functools

import jax
import jax.numpy as jnp
from jax.experimental import pallas as pl
from jax.experimental.pallas import tpu as pltpu


# bf16 matmul operands (f32 accumulation kept via preferred_element_type).
# Set to jnp.float32 for bit-closer parity with the torch f32 reference.
MATMUL_DTYPE = jnp.bfloat16

LN_EPS = 1e-5  # torch nn.LayerNorm default


# --------------------------------------------------------------------------
# In-kernel helpers (operate on values already in vregs)
# --------------------------------------------------------------------------

def _mm(a, b):
    return jnp.dot(a.astype(MATMUL_DTYPE), b.astype(MATMUL_DTYPE),
                   preferred_element_type=jnp.float32)


def _layernorm(x, g, b):
    mu = jnp.mean(x, axis=-1, keepdims=True)
    var = jnp.mean(jnp.square(x - mu), axis=-1, keepdims=True)
    return (x - mu) * jax.lax.rsqrt(var + LN_EPS) * g + b


def _erf(x):
    # Abramowitz & Stegun 7.1.26 rational approximation, |abs err| <= 1.5e-7.
    a1, a2, a3, a4, a5 = (0.254829592, -0.284496736, 1.421413741,
                          -1.453152027, 1.061405429)
    pp = 0.3275911
    sgn = jnp.where(x >= 0.0, 1.0, -1.0)
    ax = jnp.abs(x)
    t = 1.0 / (1.0 + pp * ax)
    poly = ((((a5 * t + a4) * t + a3) * t + a2) * t + a1) * t
    return sgn * (1.0 - poly * jnp.exp(-ax * ax))


def _gelu_exact(x):
    # TODO(synk): torch nn.GELU() exact-erf GELU is realized via the A&S erf
    # polynomial above (abs err <= 1.5e-7); keeps GELU fused next to the
    # matmuls instead of a standalone XLA op with extra HBM passes.
    return 0.5 * x * (1.0 + _erf(x * 0.7071067811865476))


# --------------------------------------------------------------------------
# Fused kernels.  Every block covers `bt` whole sequences of `n` tokens,
# flattened to (bt*n, D) rows.
# --------------------------------------------------------------------------

def _patch_embed_kernel(x_ref, w_ref, b_ref, pos_ref, o_ref, *, n, bt):
    # tokens = patches @ W + b + pos_embedding[:, 1:n+1]   (pos added per-seq)
    x = x_ref[...].astype(jnp.float32)                      # (bt*n, P)
    t = _mm(x, w_ref[...]) + b_ref[...]
    pos = pos_ref[...].astype(jnp.float32)                  # (n, D)
    for b in range(bt):
        r0 = b * n
        o_ref[r0:r0 + n, :] = (t[r0:r0 + n, :] + pos).astype(o_ref.dtype)


def _layer_kernel(x_ref, *refs, n, bt, heads, dim_head, scale, project_out):
    # One full transformer layer, fused:
    #   x = to_out(MHA(LN1(x))) + x ; x = W2(GELU(W1(LN2(x)))) + x
    if project_out:
        (ln1_g, ln1_b, wqkv, wout, bout,
         ln2_g, ln2_b, w1, b1, w2, b2, o_ref, attn_ref) = refs
    else:
        (ln1_g, ln1_b, wqkv,
         ln2_g, ln2_b, w1, b1, w2, b2, o_ref, attn_ref) = refs

    inner = heads * dim_head
    x = x_ref[...].astype(jnp.float32)                      # (bt*n, D)

    # ---- attention ----
    xn = _layernorm(x, ln1_g[...], ln1_b[...])
    qkv = _mm(xn, wqkv[...])                                # (bt*n, 3*inner) f32

    for b in range(bt):                                     # static unroll
        r0 = b * n
        for h in range(heads):
            lo = h * dim_head
            q = qkv[r0:r0 + n, lo:lo + dim_head] * scale    # scale folded into q
            k = qkv[r0:r0 + n, inner + lo:inner + lo + dim_head]
            v = qkv[r0:r0 + n, 2 * inner + lo:2 * inner + lo + dim_head]
            s = jax.lax.dot_general(
                q.astype(MATMUL_DTYPE), k.astype(MATMUL_DTYPE),
                (((1,), (1,)), ((), ())),
                preferred_element_type=jnp.float32)         # (n, n)
            s = s - jnp.max(s, axis=-1, keepdims=True)
            p = jnp.exp(s)
            p = p * pl.reciprocal(jnp.sum(p, axis=-1, keepdims=True), approx=True)
            attn_ref[r0:r0 + n, lo:lo + dim_head] = _mm(p, v)

    a = attn_ref[...]                                       # (bt*n, inner) f32
    if project_out:
        a = _mm(a, wout[...]) + bout[...]                   # single out-proj matmul
    x = a + x                                               # residual 1

    # ---- feed-forward ----
    xn2 = _layernorm(x, ln2_g[...], ln2_b[...])
    h = _gelu_exact(_mm(xn2, w1[...]) + b1[...])
    out = _mm(h, w2[...]) + b2[...] + x                     # residual 2
    o_ref[...] = out.astype(o_ref.dtype)


def _enc2dec_kernel(x_ref, g_ref, b_ref, w_ref, wb_ref, pos_ref, o_ref, *, n, bt):
    # dec_tokens = enc_to_dec(encoder_final_norm(x)) + decoder_pos_emb
    x = x_ref[...].astype(jnp.float32)
    xn = _layernorm(x, g_ref[...], b_ref[...])
    t = _mm(xn, w_ref[...]) + wb_ref[...]
    pos = pos_ref[...].astype(jnp.float32)
    for b in range(bt):
        r0 = b * n
        o_ref[r0:r0 + n, :] = (t[r0:r0 + n, :] + pos).astype(o_ref.dtype)


def _enc2dec_identity_kernel(x_ref, g_ref, b_ref, pos_ref, o_ref, *, n, bt):
    # enc_dim == dec_dim  ->  nn.Identity(); no matmul at all.
    x = x_ref[...].astype(jnp.float32)
    t = _layernorm(x, g_ref[...], b_ref[...])
    pos = pos_ref[...].astype(jnp.float32)
    for b in range(bt):
        r0 = b * n
        o_ref[r0:r0 + n, :] = (t[r0:r0 + n, :] + pos).astype(o_ref.dtype)


def _pool_pixels_kernel(x_ref, g_ref, b_ref, w_ref, wb_ref, o_ref, pool_ref, *, n, bt):
    # pred = to_pixels(mean_tokens(decoder_final_norm(x)))  — one (bt, D)@(D, OUT)
    x = x_ref[...].astype(jnp.float32)                      # (bt*n, D)
    xn = _layernorm(x, g_ref[...], b_ref[...])
    for b in range(bt):
        r0 = b * n
        pool_ref[b:b + 1, :] = jnp.mean(xn[r0:r0 + n, :], axis=0, keepdims=True)
    o_ref[...] = (_mm(pool_ref[...], w_ref[...]) + wb_ref[...]).astype(o_ref.dtype)


# --------------------------------------------------------------------------
# pallas_call wrappers
# --------------------------------------------------------------------------

def _grid_call(kernel, x, consts, *, grid_steps, x_block, out_shape, out_block,
               scratch_shapes=()):
    """1-D grid over row (batch-tile) blocks; all consts fully resident."""
    in_specs = [pl.BlockSpec(x_block, lambda i: (i, 0))]
    args = [x]
    for c in consts:
        in_specs.append(pl.BlockSpec(c.shape, lambda i: (0, 0)))  # all consts 2-D
        args.append(c)
    return pl.pallas_call(
        kernel,
        out_shape=jax.ShapeDtypeStruct(out_shape, x.dtype),
        grid=(grid_steps,),
        in_specs=in_specs,
        out_specs=pl.BlockSpec(out_block, lambda i: (i, 0)),
        scratch_shapes=list(scratch_shapes),
        compiler_params=pltpu.CompilerParams(dimension_semantics=("parallel",)),
    )(*args)


def _pick_batch_tile(B, N, target_rows=256):
    """Largest bt | B with bt*N <= target_rows and (8,128)-legal row blocks."""
    candidates = [bt for bt in range(1, B + 1)
                  if B % bt == 0 and bt * N <= target_rows
                  and ((bt * N) % 8 == 0 or bt == B)]
    if candidates:
        return max(candidates)
    return 1 if (N % 8 == 0 or B == 1) else B


def _run_transformer(x, tf, *, n, bt, grid_steps):
    D = x.shape[1]
    heads, dim_head = tf["heads"], tf["dim_head"]
    inner = heads * dim_head
    for layer in tf["layers"]:
        project_out = "w_out" in layer
        consts = [layer["ln1_g"], layer["ln1_b"], layer["w_qkv"]]
        if project_out:
            consts += [layer["w_out"], layer["b_out"]]
        consts += [layer["ln2_g"], layer["ln2_b"],
                   layer["w1"], layer["b1"], layer["w2"], layer["b2"]]
        kern = functools.partial(_layer_kernel, n=n, bt=bt, heads=heads,
                                 dim_head=dim_head, scale=tf["scale"],
                                 project_out=project_out)
        x = _grid_call(kern, x, consts, grid_steps=grid_steps,
                       x_block=(bt * n, D), out_shape=x.shape,
                       out_block=(bt * n, D),
                       scratch_shapes=[pltpu.VMEM((bt * n, inner), jnp.float32)])
    return x


# --------------------------------------------------------------------------
# NET forward
# --------------------------------------------------------------------------

def net_forward(scRNA, params):
    B, G = scRNA.shape
    P = params["patch_dim"]
    N = G // P
    BN = B * N
    bt = _pick_batch_tile(B, N)
    steps = B // bt

    # Rearrange('b (n p) -> b n p') flattened to rows: (B*N, P)  (free reshape)
    x = scRNA.reshape(BN, P)

    # patch_to_emb + pos_embedding[:, 1:N+1]                       (fused)
    D_enc = params["patch_w"].shape[1]
    pos = params["pos_embedding"][0, 1:N + 1]                      # (N, D_enc)
    x = _grid_call(functools.partial(_patch_embed_kernel, n=N, bt=bt),
                   x, [params["patch_w"], params["patch_b"], pos],
                   grid_steps=steps, x_block=(bt * N, P),
                   out_shape=(BN, D_enc), out_block=(bt * N, D_enc))

    # encoder transformer (one fused kernel per layer)
    enc = params["enc_tf"]
    x = _run_transformer(x, enc, n=N, bt=bt, grid_steps=steps)

    # encoder final norm + enc_to_dec + decoder pos-emb            (fused)
    dec_pos = params["decoder_pos_emb"][:N]
    if params["enc2dec_w"] is not None:
        D_dec = params["enc2dec_w"].shape[1]
        kern = functools.partial(_enc2dec_kernel, n=N, bt=bt)
        consts = [enc["norm_g"], enc["norm_b"],
                  params["enc2dec_w"], params["enc2dec_b"], dec_pos]
    else:  # nn.Identity(): LN + pos add only, no matmul
        D_dec = D_enc
        kern = functools.partial(_enc2dec_identity_kernel, n=N, bt=bt)
        consts = [enc["norm_g"], enc["norm_b"], dec_pos]
    x = _grid_call(kern, x, consts, grid_steps=steps,
                   x_block=(bt * N, D_enc),
                   out_shape=(BN, D_dec), out_block=(bt * N, D_dec))

    # decoder transformer
    dec = params["dec_tf"]
    x = _run_transformer(x, dec, n=N, bt=bt, grid_steps=steps)

    # decoder final norm + per-sequence mean + to_pixels           (fused)
    # TODO(synk): for very large B*N this single-step kernel should be tiled
    # over batch groups instead of keeping the whole (B*N, D_dec) block in VMEM.
    OUT = params["pix_w"].shape[1]
    pred = _grid_call(functools.partial(_pool_pixels_kernel, n=N, bt=B),
                      x, [dec["norm_g"], dec["norm_b"],
                          params["pix_w"], params["pix_b"]],
                      grid_steps=1, x_block=(BN, D_dec),
                      out_shape=(B, OUT), out_block=(B, OUT),
                      scratch_shapes=[pltpu.VMEM((B, D_dec), jnp.float32)])
    return pred.reshape(B, 1, OUT)


# --------------------------------------------------------------------------
# Deterministic parameter init (synthetic weights, torch-weight layout^T).
# Matmul weights stored in MATMUL_DTYPE (bf16); biases / LN / pos-emb in f32.
# --------------------------------------------------------------------------

def _init_linear(key, din, dout, bias=True, std=0.02):
    kw, kb = jax.random.split(key)
    w = (jax.random.normal(kw, (din, dout), jnp.float32) * std).astype(MATMUL_DTYPE)
    b = (jax.random.normal(kb, (1, dout), jnp.float32) * std) if bias \
        else jnp.zeros((1, dout), jnp.float32)
    return w, b


def _init_transformer(key, dim, depth, heads, dim_head, mlp_dim):
    inner = heads * dim_head
    project_out = not (heads == 1 and dim_head == dim)
    layers = []
    for _ in range(depth):
        key, k1, k2, k3, k4 = jax.random.split(key, 5)
        layer = dict(
            ln1_g=jnp.ones((1, dim), jnp.float32),
            ln1_b=jnp.zeros((1, dim), jnp.float32),
            w_qkv=_init_linear(k1, dim, 3 * inner, bias=False)[0],
            ln2_g=jnp.ones((1, dim), jnp.float32),
            ln2_b=jnp.zeros((1, dim), jnp.float32),
        )
        if project_out:  # else nn.Identity(): skipped at trace time
            layer["w_out"], layer["b_out"] = _init_linear(k2, inner, dim)
        layer["w1"], layer["b1"] = _init_linear(k3, dim, mlp_dim)
        layer["w2"], layer["b2"] = _init_linear(k4, mlp_dim, dim)
        layers.append(layer)
    return dict(layers=layers, heads=heads, dim_head=dim_head,
                scale=float(dim_head) ** -0.5,
                norm_g=jnp.ones((1, dim), jnp.float32),
                norm_b=jnp.zeros((1, dim), jnp.float32))


def init_net_params(key, *, num_patches, patch_dim, encoder_dim, decoder_dim,
                    output_size, enc_depth, enc_heads, enc_dim_head,
                    dec_depth, dec_heads, dec_dim_head):
    keys = jax.random.split(key, 8)
    patch_w, patch_b = _init_linear(keys[0], patch_dim, encoder_dim)
    pos_embedding = jax.random.normal(keys[1], (1, num_patches + 1, encoder_dim),
                                      jnp.float32) * 0.02
    enc_tf = _init_transformer(keys[2], encoder_dim, enc_depth, enc_heads,
                               enc_dim_head, encoder_dim * 4)
    if encoder_dim != decoder_dim:
        enc2dec_w, enc2dec_b = _init_linear(keys[3], encoder_dim, decoder_dim)
    else:
        enc2dec_w, enc2dec_b = None, None      # nn.Identity(): no matmul at all
    decoder_pos_emb = jax.random.normal(keys[4], (num_patches, decoder_dim),
                                        jnp.float32) * 0.02
    dec_tf = _init_transformer(keys[5], decoder_dim, dec_depth, dec_heads,
                               dec_dim_head, decoder_dim * 4)
    pix_w, pix_b = _init_linear(keys[6], decoder_dim, output_size)
    # (mask_token exists in the torch module but is unused by forward())
    return dict(patch_dim=patch_dim, patch_w=patch_w, patch_b=patch_b,
                pos_embedding=pos_embedding, enc_tf=enc_tf,
                enc2dec_w=enc2dec_w, enc2dec_b=enc2dec_b,
                decoder_pos_emb=decoder_pos_emb, dec_tf=dec_tf,
                pix_w=pix_w, pix_b=pix_b)


# --------------------------------------------------------------------------

if __name__ == "__main__":
    B = 2
    NUM_PATCHES = 8
    PATCH_DIM = 16
    ENCODER_DIM = 32
    DECODER_DIM = 64
    OUTPUT_SIZE = 128

    key = jax.random.PRNGKey(0)
    k_params, k_x = jax.random.split(key)
    params = init_net_params(
        k_params,
        num_patches=NUM_PATCHES, patch_dim=PATCH_DIM,
        encoder_dim=ENCODER_DIM, decoder_dim=DECODER_DIM,
        output_size=OUTPUT_SIZE,
        enc_depth=1, enc_heads=4, enc_dim_head=16,
        dec_depth=1, dec_heads=8, dec_dim_head=64,
    )

    scRNA = jax.random.normal(k_x, (B, NUM_PATCHES * PATCH_DIM), jnp.float32)

    out = net_forward(scRNA, params)
    out = jax.block_until_ready(out)
    assert out.shape == (B, 1, OUTPUT_SIZE), out.shape
    assert bool(jnp.all(jnp.isfinite(out)))
    print("KERNEL_OK")
</pallas_src>

<mosaic_0001>
module attributes {stable_mosaic.version = 11 : i64} {
  func.func @_patch_embed_kernel(%arg0: i32, %arg1: memref<16x16xf32, #tpu.memory_space<vmem>>, %arg2: memref<16x32xbf16, #tpu.memory_space<vmem>>, %arg3: memref<1x32xf32, #tpu.memory_space<vmem>>, %arg4: memref<8x32xf32, #tpu.memory_space<vmem>>, %arg5: memref<16x32xf32, #tpu.memory_space<vmem>>) attributes {dimension_semantics = [#tpu.dimension_semantics<parallel>], iteration_bounds = array<i64: 1>, scalar_prefetch = 0 : i64, scratch_operands = 0 : i64, tpu.core_type = #tpu.core_type<tc>, window_params = [{transform_indices = @transform_0, window_bounds = array<i64: 16, 16>}, {pipeline_mode = #tpu.pipeline_mode<synchronous>, transform_indices = @transform_1, window_bounds = array<i64: 16, 32>}, {pipeline_mode = #tpu.pipeline_mode<synchronous>, transform_indices = @transform_2, window_bounds = array<i64: 1, 32>}, {pipeline_mode = #tpu.pipeline_mode<synchronous>, transform_indices = @transform_3, window_bounds = array<i64: 8, 32>}, {transform_indices = @transform_4, window_bounds = array<i64: 16, 32>}]} {
    %c0 = arith.constant 0 : index
    %c0_0 = arith.constant 0 : index
    %0 = vector.load %arg1[%c0, %c0_0] : memref<16x16xf32, #tpu.memory_space<vmem>>, vector<16x16xf32>
    %c0_1 = arith.constant 0 : index
    %c0_2 = arith.constant 0 : index
    %1 = vector.load %arg2[%c0_1, %c0_2] : memref<16x32xbf16, #tpu.memory_space<vmem>>, vector<16x32xbf16>
    %2 = arith.truncf %0 : vector<16x16xf32> to vector<16x16xbf16>
    %cst = arith.constant dense<0.000000e+00> : vector<16x32xf32>
    %3 = tpu.matmul %2, %1, %cst {dimension_numbers = #tpu.dot_dimension_numbers<[1], [0], [0], [1], [0, 0, 1, 1], [], []>} : vector<16x16xbf16>, vector<16x32xbf16>, vector<16x32xf32> -> vector<16x32xf32>
    %c0_3 = arith.constant 0 : index
    %c0_4 = arith.constant 0 : index
    %4 = vector.load %arg3[%c0_3, %c0_4] : memref<1x32xf32, #tpu.memory_space<vmem>>, vector<1x32xf32>
    %5 = vector.broadcast %4 : vector<1x32xf32> to vector<16x32xf32>
    %6 = arith.addf %3, %5 : vector<16x32xf32>
    %c0_5 = arith.constant 0 : index
    %c0_6 = arith.constant 0 : index
    %7 = vector.load %arg4[%c0_5, %c0_6] : memref<8x32xf32, #tpu.memory_space<vmem>>, vector<8x32xf32>
    %8 = vector.extract_strided_slice %6 {offsets = [0, 0], sizes = [8, 32], strides = [1, 1]} : vector<16x32xf32> to vector<8x32xf32>
    %9 = arith.addf %8, %7 : vector<8x32xf32>
    %c0_7 = arith.constant 0 : index
    %c0_8 = arith.constant 0 : index
    %10 = vector.load %arg5[%c0_7, %c0_8] : memref<16x32xf32, #tpu.memory_space<vmem>>, vector<8x32xf32>
    tpu.vector_store %arg5[%c0_7, %c0_8], %9 {strides = array<i32>} : memref<16x32xf32, #tpu.memory_space<vmem>>, vector<8x32xf32>,
    %11 = vector.extract_strided_slice %6 {offsets = [8, 0], sizes = [8, 32], strides = [1, 1]} : vector<16x32xf32> to vector<8x32xf32>
    %12 = arith.addf %11, %7 : vector<8x32xf32>
    %c8 = arith.constant 8 : index
    %c0_9 = arith.constant 0 : index
    %13 = vector.load %arg5[%c8, %c0_9] : memref<16x32xf32, #tpu.memory_space<vmem>>, vector<8x32xf32>
    tpu.vector_store %arg5[%c8, %c0_9], %12 {strides = array<i32>} : memref<16x32xf32, #tpu.memory_space<vmem>>, vector<8x32xf32>,
    return
  }
  func.func @transform_0(%arg0: i32) -> (i32, i32) {
    %c0_i32 = arith.constant 0 : i32
    %c0_i32_0 = arith.constant 0 : i32
    return %arg0, %c0_i32 : i32, i32
  }
  func.func @transform_1(%arg0: i32) -> (i32, i32) {
    %c0_i32 = arith.constant 0 : i32
    %c0_i32_0 = arith.constant 0 : i32
    %c0_i32_1 = arith.constant 0 : i32
    return %c0_i32, %c0_i32_0 : i32, i32
  }
  func.func @transform_2(%arg0: i32) -> (i32, i32) {
    %c0_i32 = arith.constant 0 : i32
    %c0_i32_0 = arith.constant 0 : i32
    %c0_i32_1 = arith.constant 0 : i32
    return %c0_i32, %c0_i32_0 : i32, i32
  }
  func.func @transform_3(%arg0: i32) -> (i32, i32) {
    %c0_i32 = arith.constant 0 : i32
    %c0_i32_0 = arith.constant 0 : i32
    %c0_i32_1 = arith.constant 0 : i32
    return %c0_i32, %c0_i32_0 : i32, i32
  }
  func.func @transform_4(%arg0: i32) -> (i32, i32) {
    %c0_i32 = arith.constant 0 : i32
    %c0_i32_0 = arith.constant 0 : i32
    return %arg0, %c0_i32 : i32, i32
  }
}

</mosaic_0001>

<llo_original>
// kernel: tpu_custom_call.1
$region0: #{tpu_custom_call.1}
  #allocation0 [shape = 'u32[]', space=smem, size = 0x4, offset = 0x4, fixed_abs, tag = 'smem constant byte address 0x4 - core index']
  #allocation1 [shape = 'u32[144,128]{1,0:T(1,128)}', space=vmem, size = 0x12000, scoped, tag = 'internal scratch']
  %s0 = inlined_call_operand.hbm [shape: f32[16,16], index: 0, kind: input, shape index: {}]
  %s1 = inlined_call_operand.hbm [shape: bf16[16,32], index: 1, kind: input, shape index: {}]
  %s2 = inlined_call_operand.vmem [shape: f32[1,32], index: 2, kind: input, shape index: {}]
  %s3 = inlined_call_operand.hbm [shape: f32[8,32], index: 3, kind: input, shape index: {}]
  %s4 = inlined_call_operand.hbm [shape: f32[16,32], index: 4, kind: output, shape index: {}]
  %s5 = sld [smem:[#allocation0]]
  $region38: #{tpu_custom_call.1} parent=0
    _
  %s7 = ssub.s32 1, %s5
  %s8 = scalar_select 0, %s7, %s5
  $region1: #{tpu_custom_call.1} parent=0
    #allocation2 [shape = 'u8[8192]{0}', space=vmem, size = 0x2000, scoped, tag = 'input window, operand 0, single buffered']
    #allocation3 [shape = 's32[1]{0}', space=sflag, size = 0x4, scoped, tag = 'scoped memory for tpu_custom_call.1']
    #allocation4 [shape = 's32[1]{0}', space=sflag, size = 0x4, scoped, tag = 'scoped memory for tpu_custom_call.1']
    #allocation5 [shape = 'u8[4096]{0}', space=vmem, size = 0x1000, scoped, tag = 'input window, operand 1, single buffered']
    #allocation6 [shape = 's32[1]{0}', space=sflag, size = 0x4, scoped, tag = 'scoped memory for tpu_custom_call.1']
    #allocation7 [shape = 'u8[4096]{0}', space=vmem, size = 0x1000, scoped, tag = 'input window, operand 3, single buffered']
    #allocation8 [shape = 'u8[8192]{0}', space=vmem, size = 0x2000, scoped, tag = 'output window, operand 0, single buffered']
    %9 = vsyncpa [#allocation3], 0
    %10 = vsyncpa [#allocation6], 0
    %11 = vsyncpa [#allocation4], 0
    // Predicated region
    $region2: #{tpu_custom_call.1} parent=1 // pred_check
      _
    $region3: #{tpu_custom_call.1} parent=1 // pred_check_branch
      %13 = sbr.rel (0) target = $region5
    $region4: #{tpu_custom_call.1} parent=1 // pred_region
      %s15 = ssub.s32 256, 256
      %16 = vsyncadd [#allocation3], %s15
      %s17 = sshll.u32 [#allocation2], 4
      %s18 = int_to_ptr.vmem [resolvable:$true] %s17
      %23 = dma.hbm_to_vmem [thread:$0]  %s0, 256, %s18, [#allocation3], 128, 128, 8
    $region5: #{tpu_custom_call.1} parent=1 // pred_fallthru
      _
    // Predicated region
    $region6: #{tpu_custom_call.1} parent=1 // pred_check
      _
    $region7: #{tpu_custom_call.1} parent=1 // pred_check_branch
      %25 = sbr.rel (0) target = $region9
    $region8: #{tpu_custom_call.1} parent=1 // pred_region
      %s27 = ssub.s32 128, 128
      %28 = vsyncadd [#allocation6], %s27
      %s29 = sshll.u32 [#allocation5], 4
      %s30 = int_to_ptr.vmem [resolvable:$true] %s29
      %35 = dma.hbm_to_vmem [thread:$0]  %s1, 128, %s30, [#allocation6], 64, 64, 4
    $region9: #{tpu_custom_call.1} parent=1 // pred_fallthru
      _
    // Predicated region
    $region10: #{tpu_custom_call.1} parent=1 // pred_check
      _
    $region11: #{tpu_custom_call.1} parent=1 // pred_check_branch
      %37 = sbr.rel (0) target = $region13
    $region12: #{tpu_custom_call.1} parent=1 // pred_region
      _
    $region13: #{tpu_custom_call.1} parent=1 // pred_fallthru
      _
    // Predicated region
    $region14: #{tpu_custom_call.1} parent=1 // pred_check
      _
    $region15: #{tpu_custom_call.1} parent=1 // pred_check_branch
      %39 = sbr.rel (0) target = $region17
    $region16: #{tpu_custom_call.1} parent=1 // pred_region
      %s41 = ssub.s32 128, 128
      %42 = vsyncadd [#allocation6], %s41
      %s44 = sshll.u32 [#allocation7], 4
      %s45 = int_to_ptr.vmem [resolvable:$true] %s44
      %47 = dma.hbm_to_vmem [thread:$0]  %s3, 128, %s45, [#allocation6]
    $region17: #{tpu_custom_call.1} parent=1 // pred_fallthru
      _
    // Predicated region
    $region18: #{tpu_custom_call.1} parent=1 // pred_check
      _
    $region19: #{tpu_custom_call.1} parent=1 // pred_check_branch
      %49 = sbr.rel (0) target = $region21
    $region20: #{tpu_custom_call.1} parent=1 // pred_region
      %50 = dma.done [#allocation3], 256
    $region21: #{tpu_custom_call.1} parent=1 // pred_fallthru
      _
    // Predicated region
    $region22: #{tpu_custom_call.1} parent=1 // pred_check
      _
    $region23: #{tpu_custom_call.1} parent=1 // pred_check_branch
      %52 = sbr.rel (0) target = $region25
    $region24: #{tpu_custom_call.1} parent=1 // pred_region
      %53 = dma.done [#allocation6], 128
    $region25: #{tpu_custom_call.1} parent=1 // pred_fallthru
      _
    // Predicated region
    $region26: #{tpu_custom_call.1} parent=1 // pred_check
      _
    $region27: #{tpu_custom_call.1} parent=1 // pred_check_branch
      %55 = sbr.rel (0) target = $region29
    $region28: #{tpu_custom_call.1} parent=1 // pred_region
      %56 = dma.done [#allocation6], 128
    $region29: #{tpu_custom_call.1} parent=1 // pred_fallthru
      _
    %v58 = vld [vmem:[#allocation2] sm:$0xff]
    %v59 = vld [vmem:[#allocation2 + $0x8] sm:$0xff]
    %v60 = vld [vmem:[#allocation5] sm:$0xf]
    %v61 = vld [vmem:[#allocation5 + $0x4] sm:$0xf]
    %v62 = vpack.c.bf16 %v59, %v58
    %v63 = vld [vmem:[%s2] sm:$0x1]
    %v65 = vlaneseq
    %v66 = vshrl.u32 %v65, 7
    %v67 = vsub.s32 0, %v66
    %v68 = vrot.slane %v63, %v67
    %v72 = vunpack.c.l.b16 %v60
    %v73 = vunpack.c.l.b16 %v61
    %v74 = vpack.c.b16 %v73, %v72
    %vm76 = vcmask 130048
    %v78 = vsel %vm76, %v62, 0
    %80 = vmatprep.subr.bf16.mxu0 0
    %81 = vmatpush1.bf16.msra.mxu0 0
    %82 = vmatprep.subr.bf16.mxu0 0
    %83 = vmatpush1.bf16.msra.mxu0 0
    %84 = vmatprep.subr.bf16.mxu0 0
    %85 = vmatpush1.bf16.msra.mxu0 0
    %86 = vmatprep.subr.bf16.mxu0 0
    %87 = vmatpush1.bf16.msra.mxu0 0
    %88 = vmatprep.subr.bf16.mxu0 0
    %89 = vmatpush1.bf16.msra.mxu0 0
    %90 = vmatprep.subr.bf16.mxu0 0
    %91 = vmatpush1.bf16.msra.mxu0 0
    %92 = vmatprep.subr.bf16.mxu0 0
    %93 = vmatpush1.bf16.msra.mxu0 0
    %94 = vmatprep.subr.bf16.mxu0 0
    %95 = vmatpush1.bf16.msra.mxu0 %v74
    %96 = vmatprep.subr.bf16.mxu0 0
    %97 = vmatpush2.bf16.msra.mxu0 0
    %98 = vmatprep.subr.bf16.mxu0 0
    %99 = vmatpush2.bf16.msra.mxu0 0
    %100 = vmatprep.subr.bf16.mxu0 0
    %101 = vmatpush2.bf16.msra.mxu0 0
    %102 = vmatprep.subr.bf16.mxu0 0
    %103 = vmatpush2.bf16.msra.mxu0 0
    %104 = vmatprep.subr.bf16.mxu0 0
    %105 = vmatpush2.bf16.msra.mxu0 0
    %106 = vmatprep.subr.bf16.mxu0 0
    %107 = vmatpush2.bf16.msra.mxu0 0
    %108 = vmatprep.subr.bf16.mxu0 0
    %109 = vmatpush2.bf16.msra.mxu0 0
    %110 = vmatprep.subr.bf16.mxu0 0
    %111 = vmatpush2.bf16.msra.mxu0 0
    %112 = vmatprep.mubr.bf16.mxu0 0
    %113 = vmatmul.mubr.bf16.gmra.mxu0 %v78
    %v114 = vpop.f32.mrf.mxu0
    %v115 = vadd.f32 %v68, %v114
    %v116 = vpop.f32.mrf.mxu0
    %v117 = vpop.f32.mrf.mxu0
    %v118 = vadd.f32 %v68, %v117
    %v119 = vpop.f32.mrf.mxu0
    %120 = vdwg.mxu0
    %v121 = vld [vmem:[#allocation7] sm:$0xff]
    %v122 = vadd.f32 %v115, %v121
    %vm123 = vcmask 261120
    %124 = vst.msk [vmem:[#allocation8] sm:$0xff] %vm123, %v122
    %v125 = vadd.f32 %v118, %v121
    %126 = vst.msk [vmem:[#allocation8 + $0x8] sm:$0xff] %vm123, %v125
    // Predicated region
    $region30: #{tpu_custom_call.1} parent=1 // pred_check
      _
    $region31: #{tpu_custom_call.1} parent=1 // pred_check_branch
      %128 = sbr.rel (0) target = $region33
    $region32: #{tpu_custom_call.1} parent=1 // pred_region
      %s130 = ssub.s32 256, 256
      %131 = vsyncadd [#allocation4], %s130
      %s132 = sshll.u32 [#allocation8], 4
      %s133 = int_to_ptr.vmem [resolvable:$true] %s132
      %138 = dma.vmem_to_hbm [thread:$0]  %s133, 256, %s4, [#allocation4], 128, 128, 8
    $region33: #{tpu_custom_call.1} parent=1 // pred_fallthru
      _
    // Predicated region
    $region34: #{tpu_custom_call.1} parent=1 // pred_check
      _
    $region35: #{tpu_custom_call.1} parent=1 // pred_check_branch
      %140 = sbr.rel (0) target = $region37
    $region36: #{tpu_custom_call.1} parent=1 // pred_region
      %141 = dma.done [#allocation4], 256
    $region37: #{tpu_custom_call.1} parent=1 // pred_fallthru
      _
    %142 = vsyncpa [#allocation3], 1
    %143 = vsyncpa [#allocation6], 1
    %144 = vsyncpa [#allocation4], 1

</llo_original>
